<compile_context>
chip_gen: v5e
topology: v5e:2x2
jax: 0.10.0
libtpu: 0.0.40
codegen_flags: <defaults>
</compile_context>

<pallas_src>
import math

import jax
import jax.numpy as jnp
from jax import lax
from jax.experimental import pallas as pl
from jax.experimental.pallas import tpu as pltpu


def _gelu_exact(x):
    # torch.nn.GELU() default = exact erf formulation (computed in f32).
    return 0.5 * x * (1.0 + lax.erf(x * (1.0 / math.sqrt(2.0))))


def _partial_mlp(x_ref, wfc_ref, bfc_ref, wproj_ref, h_idx):
    """c_fc tile matmul + bias + GELU + c_proj partial contraction (f32 out)."""
    xb = x_ref[...].astype(jnp.bfloat16)
    h = jnp.dot(xb, wfc_ref[...], preferred_element_type=jnp.float32)
    h = _gelu_exact(h + bfc_ref[pl.ds(h_idx, 1), :])
    return jnp.dot(h.astype(jnp.bfloat16), wproj_ref[...],
                   preferred_element_type=jnp.float32)


def _mlp_kernel_f32(x_ref, wfc_ref, bfc_ref, wproj_ref, bproj_ref, out_ref):
    """f32 output: accumulate directly into the resident output tile."""
    h_idx = pl.program_id(1)

    @pl.when(h_idx == 0)
    def _():
        out_ref[...] = jnp.zeros_like(out_ref)

    out_ref[...] += _partial_mlp(x_ref, wfc_ref, bfc_ref, wproj_ref, h_idx)

    @pl.when(h_idx == pl.num_programs(1) - 1)
    def _():
        out_ref[...] += bproj_ref[...]
        # TODO(synk): dropout omitted (inference path, p = 0 -> identity).


def _mlp_kernel_acc(x_ref, wfc_ref, bfc_ref, wproj_ref, bproj_ref, out_ref,
                    acc_ref):
    """Non-f32 output: f32 VMEM accumulator, cast on the last hidden tile."""
    h_idx = pl.program_id(1)

    @pl.when(h_idx == 0)
    def _():
        acc_ref[...] = jnp.zeros_like(acc_ref)

    acc_ref[...] += _partial_mlp(x_ref, wfc_ref, bfc_ref, wproj_ref, h_idx)

    @pl.when(h_idx == pl.num_programs(1) - 1)
    def _():
        out_ref[...] = (acc_ref[...] + bproj_ref[...]).astype(out_ref.dtype)


def _round_up(x, m):
    return (x + m - 1) // m * m


def _round_down(x, m):
    return max(m, x // m * m)


def _pick_block(dim, target, align):
    """Largest multiple of `align` dividing `dim` and <= `target`; else `dim`."""
    if dim <= target:
        return dim
    best = None
    b = align
    while b <= target:
        if dim % b == 0:
            best = b
        b += align
    return best if best is not None else dim


def _vmem_budget_bytes():
    try:
        cap = pltpu.get_tpu_info().vmem_capacity_bytes
    except Exception:
        cap = 64 * 1024 * 1024          # conservative fallback (v7x per-TC)
    return int(cap * 0.8)               # leave headroom for compiler scratch


def _vmem_estimate(bm, bh, C, Hd, in_bytes, out_bytes, use_acc):
    wt = 2                               # bf16 weights
    b = 2 * bm * C * in_bytes            # x tile (double-buffered)
    b += 2 * bm * C * out_bytes          # out tile (double-buffered)
    b += 2 * C * bh * wt                 # c_fc weight tile (double-buffered)
    b += 2 * bh * C * wt                 # c_proj weight tile (double-buffered)
    b += Hd * 4 + C * 4                  # resident biases
    b += bm * bh * 6                     # GELU temp (f32) + bf16 cast
    if use_acc:
        b += bm * C * 4                  # f32 accumulator scratch
    return b


def mlp_forward(x, w_fc, b_fc, w_proj, b_proj, *, block_m=512, block_h=512):
    """y = GELU(x @ w_fc + b_fc) @ w_proj + b_proj   (dropout = identity)."""
    B, T, C = x.shape
    Hd = w_fc.shape[1]
    M = B * T
    out_dtype = x.dtype
    use_acc = jnp.dtype(out_dtype) != jnp.dtype(jnp.float32)

    in_bytes = jnp.dtype(x.dtype).itemsize
    out_bytes = jnp.dtype(out_dtype).itemsize

    # 128-aligned M tile (pad M up as needed -> full MXU passes, legal layouts).
    bm = max(128, min(_round_up(M, 128), _round_down(block_m, 128)))
    # Hidden tile: multiple of 128 dividing Hd (fallback: full Hd).
    bh = _pick_block(Hd, block_h, 128)

    # Shrink tiles until the double-buffered working set fits the VMEM budget.
    budget = _vmem_budget_bytes()
    for _ in range(16):
        if _vmem_estimate(bm, bh, C, Hd, in_bytes, out_bytes, use_acc) <= budget:
            break
        new_bh = _pick_block(Hd, max(128, bh // 2), 128)
        if new_bh < bh:
            bh = new_bh
        elif bm > 128:
            bm = _round_down(bm // 2, 128)
        else:
            break

    M_pad = _round_up(M, bm)
    xm = x.reshape(M, C)
    if M_pad != M:
        xm = jnp.pad(xm, ((0, M_pad - M), (0, 0)))

    n_h = Hd // bh
    # bf16 weights: MXU-native, halves HBM traffic and VMEM tile size.
    wfc_b = w_fc.astype(jnp.bfloat16)
    wproj_b = w_proj.astype(jnp.bfloat16)
    bfc = b_fc.astype(jnp.float32).reshape(n_h, bh)    # resident, sublane-indexed
    bproj = b_proj.astype(jnp.float32).reshape(1, C)   # resident

    grid = (M_pad // bm, n_h)
    kernel = _mlp_kernel_acc if use_acc else _mlp_kernel_f32
    scratch = [pltpu.VMEM((bm, C), jnp.float32)] if use_acc else []

    out = pl.pallas_call(
        kernel,
        out_shape=jax.ShapeDtypeStruct((M_pad, C), out_dtype),
        grid=grid,
        in_specs=[
            pl.BlockSpec((bm, C), lambda m, h: (m, 0)),    # x rows
            pl.BlockSpec((C, bh), lambda m, h: (0, h)),    # c_fc weight tile
            pl.BlockSpec((n_h, bh), lambda m, h: (0, 0)),  # c_fc bias (resident)
            pl.BlockSpec((bh, C), lambda m, h: (h, 0)),    # c_proj weight tile
            pl.BlockSpec((1, C), lambda m, h: (0, 0)),     # c_proj bias (resident)
        ],
        out_specs=pl.BlockSpec((bm, C), lambda m, h: (m, 0)),
        scratch_shapes=scratch,
        compiler_params=pltpu.CompilerParams(
            dimension_semantics=("parallel", "arbitrary"),
            vmem_limit_bytes=budget,
        ),
    )(xm, wfc_b, bfc, wproj_b, bproj)
    return out[:M].reshape(B, T, C)


def reference(x, w_fc, b_fc, w_proj, b_proj):
    """Pure-JAX f32 mirror of the PyTorch MLP forward (inference)."""
    h = _gelu_exact(x @ w_fc + b_fc[0])
    return h @ w_proj + b_proj[0]


if __name__ == "__main__":
    # Small config consistent with the module: n_embd=32 -> hidden=128.
    B, T, C = 2, 8, 32
    Hd = 4 * C

    key = jax.random.PRNGKey(0)
    kx, kw1, kb1, kw2, kb2 = jax.random.split(key, 5)

    x = jax.random.normal(kx, (B, T, C), dtype=jnp.float32)
    # Deterministic parameter init (Linear-like scaling); weights stored (in, out).
    w_fc = jax.random.normal(kw1, (C, Hd), dtype=jnp.float32) / math.sqrt(C)
    b_fc = jax.random.normal(kb1, (1, Hd), dtype=jnp.float32) * 0.01
    w_proj = jax.random.normal(kw2, (Hd, C), dtype=jnp.float32) / math.sqrt(Hd)
    b_proj = jax.random.normal(kb2, (1, C), dtype=jnp.float32) * 0.01

    out = mlp_forward(x, w_fc, b_fc, w_proj, b_proj)
    out = jax.block_until_ready(out)

    ref = reference(x, w_fc, b_fc, w_proj, b_proj)
    assert out.shape == (B, T, C), out.shape
    err = float(jnp.max(jnp.abs(out - ref)))
    # bf16 MXU inputs with f32 accumulation: small rounding vs the pure-f32 ref.
    assert err < 5e-2, err

    print("KERNEL_OK")
</pallas_src>

<mosaic_0001>
module attributes {stable_mosaic.version = 11 : i64} {
  func.func @_mlp_kernel_f32(%arg0: i32, %arg1: i32, %arg2: memref<128x32xf32, #tpu.memory_space<vmem>>, %arg3: memref<32x128xbf16, #tpu.memory_space<vmem>>, %arg4: memref<1x128xf32, #tpu.memory_space<vmem>>, %arg5: memref<128x32xbf16, #tpu.memory_space<vmem>>, %arg6: memref<1x32xf32, #tpu.memory_space<vmem>>, %arg7: memref<128x32xf32, #tpu.memory_space<vmem>>) attributes {dimension_semantics = [#tpu.dimension_semantics<parallel>, #tpu.dimension_semantics<arbitrary>], iteration_bounds = array<i64: 1, 1>, scalar_prefetch = 0 : i64, scratch_operands = 0 : i64, tpu.core_type = #tpu.core_type<tc>, window_params = [{transform_indices = @transform_0, window_bounds = array<i64: 128, 32>}, {transform_indices = @transform_1, window_bounds = array<i64: 32, 128>}, {pipeline_mode = #tpu.pipeline_mode<synchronous>, transform_indices = @transform_2, window_bounds = array<i64: 1, 128>}, {transform_indices = @transform_3, window_bounds = array<i64: 128, 32>}, {pipeline_mode = #tpu.pipeline_mode<synchronous>, transform_indices = @transform_4, window_bounds = array<i64: 1, 32>}, {transform_indices = @transform_5, window_bounds = array<i64: 128, 32>}]} {
    %c0_i32 = arith.constant 0 : i32
    %0 = arith.cmpi eq, %arg1, %c0_i32 : i32
    %1 = arith.extui %0 : i1 to i32
    %c0_i32_0 = arith.constant 0 : i32
    %2 = arith.cmpi ne, %1, %c0_i32_0 : i32
    scf.if %2 {
      %cst_17 = arith.constant 0.000000e+00 : f32
      %28 = vector.broadcast %cst_17 : f32 to vector<128x32xf32>
      %c0_18 = arith.constant 0 : index
      %c0_19 = arith.constant 0 : index
      %29 = vector.load %arg7[%c0_18, %c0_19] : memref<128x32xf32, #tpu.memory_space<vmem>>, vector<128x32xf32>
      tpu.vector_store %arg7[%c0_18, %c0_19], %28 {strides = array<i32>} : memref<128x32xf32, #tpu.memory_space<vmem>>, vector<128x32xf32>,
    } else {
    }
    %c0 = arith.constant 0 : index
    %c0_1 = arith.constant 0 : index
    %3 = vector.load %arg7[%c0, %c0_1] : memref<128x32xf32, #tpu.memory_space<vmem>>, vector<128x32xf32>
    %c0_2 = arith.constant 0 : index
    %c0_3 = arith.constant 0 : index
    %4 = vector.load %arg2[%c0_2, %c0_3] : memref<128x32xf32, #tpu.memory_space<vmem>>, vector<128x32xf32>
    %5 = arith.truncf %4 : vector<128x32xf32> to vector<128x32xbf16>
    %c0_4 = arith.constant 0 : index
    %c0_5 = arith.constant 0 : index
    %6 = vector.load %arg3[%c0_4, %c0_5] : memref<32x128xbf16, #tpu.memory_space<vmem>>, vector<32x128xbf16>
    %cst = arith.constant dense<0.000000e+00> : vector<128x128xf32>
    %7 = tpu.matmul %5, %6, %cst {dimension_numbers = #tpu.dot_dimension_numbers<[1], [0], [0], [1], [0, 0, 1, 1], [], []>} : vector<128x32xbf16>, vector<32x128xbf16>, vector<128x128xf32> -> vector<128x128xf32>
    %8 = arith.index_cast %arg1 : i32 to index
    %c0_6 = arith.constant 0 : index
    %9 = vector.load %arg4[%8, %c0_6] : memref<1x128xf32, #tpu.memory_space<vmem>>, vector<1x128xf32>
    %10 = vector.broadcast %9 : vector<1x128xf32> to vector<128x128xf32>
    %11 = arith.addf %7, %10 : vector<128x128xf32>
    %cst_7 = arith.constant 5.000000e-01 : f32
    %12 = vector.broadcast %cst_7 : f32 to vector<128x128xf32>
    %13 = arith.mulf %12, %11 : vector<128x128xf32>
    %cst_8 = arith.constant 0.707106769 : f32
    %14 = vector.broadcast %cst_8 : f32 to vector<128x128xf32>
    %15 = arith.mulf %11, %14 : vector<128x128xf32>
    %16 = math.erf %15 : vector<128x128xf32>
    %cst_9 = arith.constant 1.000000e+00 : f32
    %17 = vector.broadcast %cst_9 : f32 to vector<128x128xf32>
    %18 = arith.addf %17, %16 : vector<128x128xf32>
    %19 = arith.mulf %13, %18 : vector<128x128xf32>
    %20 = arith.truncf %19 : vector<128x128xf32> to vector<128x128xbf16>
    %c0_10 = arith.constant 0 : index
    %c0_11 = arith.constant 0 : index
    %21 = vector.load %arg5[%c0_10, %c0_11] : memref<128x32xbf16, #tpu.memory_space<vmem>>, vector<128x32xbf16>
    %cst_12 = arith.constant dense<0.000000e+00> : vector<128x32xf32>
    %22 = tpu.matmul %20, %21, %cst_12 {dimension_numbers = #tpu.dot_dimension_numbers<[1], [0], [0], [1], [0, 0, 1, 1], [], []>} : vector<128x128xbf16>, vector<128x32xbf16>, vector<128x32xf32> -> vector<128x32xf32>
    %23 = arith.addf %3, %22 : vector<128x32xf32>
    %c0_13 = arith.constant 0 : index
    %c0_14 = arith.constant 0 : index
    %24 = vector.load %arg7[%c0_13, %c0_14] : memref<128x32xf32, #tpu.memory_space<vmem>>, vector<128x32xf32>
    tpu.vector_store %arg7[%c0_13, %c0_14], %23 {strides = array<i32>} : memref<128x32xf32, #tpu.memory_space<vmem>>, vector<128x32xf32>,
    %c0_i32_15 = arith.constant 0 : i32
    %25 = arith.cmpi eq, %arg1, %c0_i32_15 : i32
    %26 = arith.extui %25 : i1 to i32
    %c0_i32_16 = arith.constant 0 : i32
    %27 = arith.cmpi ne, %26, %c0_i32_16 : i32
    scf.if %27 {
      %c0_17 = arith.constant 0 : index
      %c0_18 = arith.constant 0 : index
      %28 = vector.load %arg7[%c0_17, %c0_18] : memref<128x32xf32, #tpu.memory_space<vmem>>, vector<128x32xf32>
      %c0_19 = arith.constant 0 : index
      %c0_20 = arith.constant 0 : index
      %29 = vector.load %arg6[%c0_19, %c0_20] : memref<1x32xf32, #tpu.memory_space<vmem>>, vector<1x32xf32>
      %30 = vector.broadcast %29 : vector<1x32xf32> to vector<128x32xf32>
      %31 = arith.addf %28, %30 : vector<128x32xf32>
      %c0_21 = arith.constant 0 : index
      %c0_22 = arith.constant 0 : index
      %32 = vector.load %arg7[%c0_21, %c0_22] : memref<128x32xf32, #tpu.memory_space<vmem>>, vector<128x32xf32>
      tpu.vector_store %arg7[%c0_21, %c0_22], %31 {strides = array<i32>} : memref<128x32xf32, #tpu.memory_space<vmem>>, vector<128x32xf32>,
    } else {
    }
    return
  }
  func.func @transform_0(%arg0: i32, %arg1: i32) -> (i32, i32) {
    %c0_i32 = arith.constant 0 : i32
    %c0_i32_0 = arith.constant 0 : i32
    return %arg0, %c0_i32 : i32, i32
  }
  func.func @transform_1(%arg0: i32, %arg1: i32) -> (i32, i32) {
    %c0_i32 = arith.constant 0 : i32
    %c0_i32_0 = arith.constant 0 : i32
    return %c0_i32, %arg1 : i32, i32
  }
  func.func @transform_2(%arg0: i32, %arg1: i32) -> (i32, i32) {
    %c0_i32 = arith.constant 0 : i32
    %c0_i32_0 = arith.constant 0 : i32
    %c0_i32_1 = arith.constant 0 : i32
    return %c0_i32, %c0_i32_0 : i32, i32
  }
  func.func @transform_3(%arg0: i32, %arg1: i32) -> (i32, i32) {
    %c0_i32 = arith.constant 0 : i32
    %c0_i32_0 = arith.constant 0 : i32
    return %arg1, %c0_i32 : i32, i32
  }
  func.func @transform_4(%arg0: i32, %arg1: i32) -> (i32, i32) {
    %c0_i32 = arith.constant 0 : i32
    %c0_i32_0 = arith.constant 0 : i32
    %c0_i32_1 = arith.constant 0 : i32
    return %c0_i32, %c0_i32_0 : i32, i32
  }
  func.func @transform_5(%arg0: i32, %arg1: i32) -> (i32, i32) {
    %c0_i32 = arith.constant 0 : i32
    %c0_i32_0 = arith.constant 0 : i32
    return %arg0, %c0_i32 : i32, i32
  }
}

</mosaic_0001>

<llo_original>
// kernel: tpu_custom_call.1
$region0: #{tpu_custom_call.1}
  #allocation0 [shape = 'u32[]', space=smem, size = 0x4, offset = 0x4, fixed_abs, tag = 'smem constant byte address 0x4 - core index']
  #allocation1 [shape = 'u32[72,128]{1,0:T(1,128)}', space=vmem, size = 0x9000, scoped, tag = 'internal scratch']
  %s0 = inlined_call_operand.vmem [shape: f32[128,32], index: 0, kind: input, shape index: {}]
  %s1 = inlined_call_operand.vmem [shape: bf16[32,128], index: 1, kind: input, shape index: {}]
  %s2 = inlined_call_operand.vmem [shape: f32[1,128], index: 2, kind: input, shape index: {}]
  %s3 = inlined_call_operand.vmem [shape: bf16[128,32], index: 3, kind: input, shape index: {}]
  %s4 = inlined_call_operand.vmem [shape: f32[1,32], index: 4, kind: input, shape index: {}]
  %s5 = inlined_call_operand.vmem [shape: f32[128,32], index: 5, kind: output, shape index: {}]
  %s6 = sld [smem:[#allocation0]]
  $region38: #{tpu_custom_call.1} parent=0
    _
  %s8 = ssub.s32 1, %s6
  %s9 = scalar_select 0, %s8, %s6
  // Predicated region
  $region2: #{tpu_custom_call.1} parent=0 // pred_check
    _
  $region3: #{tpu_custom_call.1} parent=0 // pred_check_branch
    %11 = sbr.rel (0) target = $region5
  $region4: #{tpu_custom_call.1} parent=0 // pred_region
    _
  $region5: #{tpu_custom_call.1} parent=0 // pred_fallthru
    _
  // Predicated region
  $region6: #{tpu_custom_call.1} parent=0 // pred_check
    _
  $region7: #{tpu_custom_call.1} parent=0 // pred_check_branch
    %13 = sbr.rel (0) target = $region9
  $region8: #{tpu_custom_call.1} parent=0 // pred_region
    _
  $region9: #{tpu_custom_call.1} parent=0 // pred_fallthru
    _
  // Predicated region
  $region10: #{tpu_custom_call.1} parent=0 // pred_check
    _
  $region11: #{tpu_custom_call.1} parent=0 // pred_check_branch
    %15 = sbr.rel (0) target = $region13
  $region12: #{tpu_custom_call.1} parent=0 // pred_region
    _
  $region13: #{tpu_custom_call.1} parent=0 // pred_fallthru
    _
  // Predicated region
  $region14: #{tpu_custom_call.1} parent=0 // pred_check
    _
  $region15: #{tpu_custom_call.1} parent=0 // pred_check_branch
    %17 = sbr.rel (0) target = $region17
  $region16: #{tpu_custom_call.1} parent=0 // pred_region
    _
  $region17: #{tpu_custom_call.1} parent=0 // pred_fallthru
    _
  // Predicated region
  $region18: #{tpu_custom_call.1} parent=0 // pred_check
    _
  $region19: #{tpu_custom_call.1} parent=0 // pred_check_branch
    %19 = sbr.rel (0) target = $region21
  $region20: #{tpu_custom_call.1} parent=0 // pred_region
    _
  $region21: #{tpu_custom_call.1} parent=0 // pred_fallthru
    _
  %p21 = scmp.eq.s32.totalorder 0, 0
  // Predicated region
  $region22: #{tpu_custom_call.1} parent=0 // pred_check
    %p22 = pneg %p21
  $region23: #{tpu_custom_call.1} parent=0 // pred_check_branch
    %24 = sbr.rel (%p22) target = $region25
  $region24: #{tpu_custom_call.1} parent=0 // pred_region
    %vm25 = vcmask 261120
    %26 = vst.msk [vmem:[%s5] sm:$0xff] %vm25, 0.0
    %27 = vst.msk [vmem:[%s5 + $0x8] sm:$0xff] %vm25, 0.0
    %28 = vst.msk [vmem:[%s5 + $0x10] sm:$0xff] %vm25, 0.0
    %29 = vst.msk [vmem:[%s5 + $0x18] sm:$0xff] %vm25, 0.0
    %30 = vst.msk [vmem:[%s5 + $0x20] sm:$0xff] %vm25, 0.0
    %31 = vst.msk [vmem:[%s5 + $0x28] sm:$0xff] %vm25, 0.0
    %32 = vst.msk [vmem:[%s5 + $0x30] sm:$0xff] %vm25, 0.0
    %33 = vst.msk [vmem:[%s5 + $0x38] sm:$0xff] %vm25, 0.0
    %34 = vst.msk [vmem:[%s5 + $0x40] sm:$0xff] %vm25, 0.0
    %35 = vst.msk [vmem:[%s5 + $0x48] sm:$0xff] %vm25, 0.0
    %36 = vst.msk [vmem:[%s5 + $0x50] sm:$0xff] %vm25, 0.0
    %37 = vst.msk [vmem:[%s5 + $0x58] sm:$0xff] %vm25, 0.0
    %38 = vst.msk [vmem:[%s5 + $0x60] sm:$0xff] %vm25, 0.0
    %39 = vst.msk [vmem:[%s5 + $0x68] sm:$0xff] %vm25, 0.0
    %40 = vst.msk [vmem:[%s5 + $0x70] sm:$0xff] %vm25, 0.0
    %41 = vst.msk [vmem:[%s5 + $0x78] sm:$0xff] %vm25, 0.0
  $region25: #{tpu_custom_call.1} parent=0 // pred_fallthru
    _
  %v42 = vld [vmem:[%s5] sm:$0xff]
  %v43 = vld [vmem:[%s5 + $0x8] sm:$0xff]
  %v44 = vld [vmem:[%s5 + $0x10] sm:$0xff]
  %v45 = vld [vmem:[%s5 + $0x18] sm:$0xff]
  %v46 = vld [vmem:[%s5 + $0x20] sm:$0xff]
  %v47 = vld [vmem:[%s5 + $0x28] sm:$0xff]
  %v48 = vld [vmem:[%s5 + $0x30] sm:$0xff]
  %v49 = vld [vmem:[%s5 + $0x38] sm:$0xff]
  %v50 = vld [vmem:[%s5 + $0x40] sm:$0xff]
  %v51 = vld [vmem:[%s5 + $0x48] sm:$0xff]
  %v52 = vld [vmem:[%s5 + $0x50] sm:$0xff]
  %v53 = vld [vmem:[%s5 + $0x58] sm:$0xff]
  %v54 = vld [vmem:[%s5 + $0x60] sm:$0xff]
  %v55 = vld [vmem:[%s5 + $0x68] sm:$0xff]
  %v56 = vld [vmem:[%s5 + $0x70] sm:$0xff]
  %v57 = vld [vmem:[%s5 + $0x78] sm:$0xff]
  %v58 = vld [vmem:[%s0] sm:$0xff]
  %v59 = vld [vmem:[%s0 + $0x8] sm:$0xff]
  %v60 = vld [vmem:[%s0 + $0x10] sm:$0xff]
  %v61 = vld [vmem:[%s0 + $0x18] sm:$0xff]
  %v62 = vld [vmem:[%s0 + $0x20] sm:$0xff]
  %v63 = vld [vmem:[%s0 + $0x28] sm:$0xff]
  %v64 = vld [vmem:[%s0 + $0x30] sm:$0xff]
  %v65 = vld [vmem:[%s0 + $0x38] sm:$0xff]
  %v66 = vld [vmem:[%s0 + $0x40] sm:$0xff]
  %v67 = vld [vmem:[%s0 + $0x48] sm:$0xff]
  %v68 = vld [vmem:[%s0 + $0x50] sm:$0xff]
  %v69 = vld [vmem:[%s0 + $0x58] sm:$0xff]
  %v70 = vld [vmem:[%s0 + $0x60] sm:$0xff]
  %v71 = vld [vmem:[%s0 + $0x68] sm:$0xff]
  %v72 = vld [vmem:[%s0 + $0x70] sm:$0xff]
  %v73 = vld [vmem:[%s0 + $0x78] sm:$0xff]
  %v74 = vpack.c.bf16 %v59, %v58
  %v75 = vpack.c.bf16 %v61, %v60
  %v76 = vpack.c.bf16 %v63, %v62
  %v77 = vpack.c.bf16 %v65, %v64
  %v78 = vpack.c.bf16 %v67, %v66
  %v79 = vpack.c.bf16 %v69, %v68
  %v80 = vpack.c.bf16 %v71, %v70
  %v81 = vpack.c.bf16 %v73, %v72
  %v82 = vld [vmem:[%s1] sm:$0xf]
  %v83 = vld [vmem:[%s1 + $0x4] sm:$0xf]
  %v84 = vld [vmem:[%s1 + $0x8] sm:$0xf]
  %v85 = vld [vmem:[%s1 + $0xc] sm:$0xf]
  %v86 = vld [vmem:[%s2] sm:$0x1]
  %v88 = vperm.slane %v86, 0
  %v94 = vunpack.c.l.b16 %v82
  %v95 = vunpack.c.l.b16 %v83
  %v96 = vunpack.c.l.b16 %v84
  %v97 = vunpack.c.l.b16 %v85
  %v98 = vpack.c.b16 %v95, %v94
  %v99 = vpack.c.b16 %v97, %v96
  %vm102 = vcmask 261120
  %v104 = vsel %vm102, %v74, 0
  %v107 = vsel %vm102, %v75, 0
  %v110 = vsel %vm102, %v76, 0
  %v113 = vsel %vm102, %v77, 0
  %v116 = vsel %vm102, %v78, 0
  %v119 = vsel %vm102, %v79, 0
  %v122 = vsel %vm102, %v80, 0
  %v125 = vsel %vm102, %v81, 0
  %127 = vmatpush.bf16.msra.mxu0 0
  %128 = vmatpush.bf16.msra.mxu0 0
  %129 = vmatpush.bf16.msra.mxu0 0
  %130 = vmatpush.bf16.msra.mxu0 0
  %131 = vmatpush.bf16.msra.mxu0 0
  %132 = vmatpush.bf16.msra.mxu0 0
  %133 = vmatpush.bf16.msra.mxu0 %v99
  %134 = vmatpush.bf16.msra.mxu0 %v98
  %135 = vmatmul.bf16.gmra.mxu0 %v104
  %v136 = vpop.f32.mrf.mxu0
  %v137 = vadd.f32 %v88, %v136
  %v138 = vpop.f32.mrf.mxu0
  %v139 = vadd.f32 %v88, %v138
  %140 = vmatmul.bf16.gmra.mxu0 %v107
  %v141 = vpop.f32.mrf.mxu0
  %v142 = vadd.f32 %v88, %v141
  %v143 = vpop.f32.mrf.mxu0
  %v144 = vadd.f32 %v88, %v143
  %145 = vmatmul.bf16.gmra.mxu0 %v110
  %v146 = vpop.f32.mrf.mxu0
  %v147 = vadd.f32 %v88, %v146
  %v148 = vpop.f32.mrf.mxu0
  %v149 = vadd.f32 %v88, %v148
  %150 = vmatmul.bf16.gmra.mxu0 %v113
  %v151 = vpop.f32.mrf.mxu0
  %v152 = vadd.f32 %v88, %v151
  %v153 = vpop.f32.mrf.mxu0
  %v154 = vadd.f32 %v88, %v153
  %155 = vmatmul.bf16.gmra.mxu0 %v116
  %v156 = vpop.f32.mrf.mxu0
  %v157 = vadd.f32 %v88, %v156
  %v158 = vpop.f32.mrf.mxu0
  %v159 = vadd.f32 %v88, %v158
  %160 = vmatmul.bf16.gmra.mxu0 %v119
  %v161 = vpop.f32.mrf.mxu0
  %v162 = vadd.f32 %v88, %v161
  %v163 = vpop.f32.mrf.mxu0
  %v164 = vadd.f32 %v88, %v163
  %165 = vmatmul.bf16.gmra.mxu0 %v122
  %v166 = vpop.f32.mrf.mxu0
  %v167 = vadd.f32 %v88, %v166
  %v168 = vpop.f32.mrf.mxu0
  %v169 = vadd.f32 %v88, %v168
  %170 = vmatmul.bf16.gmra.mxu0 %v125
  %v171 = vpop.f32.mrf.mxu0
  %v172 = vadd.f32 %v88, %v171
  %v173 = vpop.f32.mrf.mxu0
  %v174 = vadd.f32 %v88, %v173
  %175 = vdwg.mxu0
  %v176 = vmul.f32 %v137, 0.5
  %v177 = vmul.f32 %v139, 0.5
  %v178 = vmul.f32 %v142, 0.5
  %v179 = vmul.f32 %v144, 0.5
  %v180 = vmul.f32 %v147, 0.5
  %v181 = vmul.f32 %v149, 0.5
  %v182 = vmul.f32 %v152, 0.5
  %v183 = vmul.f32 %v154, 0.5
  %v184 = vmul.f32 %v157, 0.5
  %v185 = vmul.f32 %v159, 0.5
  %v186 = vmul.f32 %v162, 0.5
  %v187 = vmul.f32 %v164, 0.5
  %v188 = vmul.f32 %v167, 0.5
  %v189 = vmul.f32 %v169, 0.5
  %v190 = vmul.f32 %v172, 0.5
  %v191 = vmul.f32 %v174, 0.5
  %v192 = vmul.f32 %v137, 0.70710677
  %v193 = vmul.f32 %v139, 0.70710677
  %v194 = vmul.f32 %v142, 0.70710677
  %v195 = vmul.f32 %v144, 0.70710677
  %v196 = vmul.f32 %v147, 0.70710677
  %v197 = vmul.f32 %v149, 0.70710677
  %v198 = vmul.f32 %v152, 0.70710677
  %v199 = vmul.f32 %v154, 0.70710677
  %v200 = vmul.f32 %v157, 0.70710677
  %v201 = vmul.f32 %v159, 0.70710677
  %v202 = vmul.f32 %v162, 0.70710677
  %v203 = vmul.f32 %v164, 0.70710677
  %v204 = vmul.f32 %v167, 0.70710677
  %v205 = vmul.f32 %v169, 0.70710677
  %v206 = vmul.f32 %v172, 0.70710677
  %v207 = vmul.f32 %v174, 0.70710677
  %v208 = vmul.f32 %v192, %v192
  %v209 = vmin.f32 16.0, %v208
  %v210 = vmul.f32 %v209, 2.1237322e-06
  %v211 = vadd.f32 %v210, 0.00028619796
  %v212 = vmul.f32 %v209, %v211
  %v213 = vadd.f32 %v212, 0.0036580483
  %v214 = vmul.f32 %v209, %v213
  %v215 = vadd.f32 %v214, 0.05243302
  %v216 = vmul.f32 %v209, %v215
  %v217 = vadd.f32 %v216, 0.18741608
  %v218 = vmul.f32 %v209, %v217
  %v219 = vadd.f32 %v218, 1.1283791
  %v220 = vmul.f32 %v192, %v219
  %v221 = vmul.f32 %v209, 3.8918573e-05
  %v222 = vadd.f32 %v221, 0.001143296
  %v223 = vmul.f32 %v209, %v222
  %v224 = vadd.f32 %v223, 0.014752088
  %v225 = vmul.f32 %v209, %v224
  %v226 = vadd.f32 %v225, 0.112945676
  %v227 = vmul.f32 %v209, %v226
  %v228 = vadd.f32 %v227, 0.4994258
  %v229 = vmul.f32 %v209, %v228
  %v230 = vadd.f32 %v229, 1.0
  %v231 = vrcp.pop %v230
  %v232 = vmul.f32 %v230, %v231
  %v233 = vsub.f32 1.0, %v232
  %v234 = vmul.f32 %v231, %v233
  %v235 = vadd.f32 %v231, %v234
  %vm236 = vweird.f32 %v230
  %vm237 = vweird.f32 %v231
  %vm238 = vmor %vm236, %vm237
  %v239 = vsel %vm238, %v231, %v235
  %v240 = vand.u32 2147483647, %v230
  %vm241 = vcmp.eq.f32.partialorder %v240, 8.507059e+37
  %v242 = vand.u32 %v230, 2147483648
  %v243 = vor.u32 1.1754944e-38, %v242
  %v244 = vsel %vm241, %v243, %v239
  %v245 = vmul.f32 %v220, %v244
  %v246 = vmin.f32 %v245, 1.0
  %v247 = vmax.f32 %v246, -1.0
  %v248 = vmul.f32 %v193, %v193
  %v249 = vmin.f32 16.0, %v248
  %v250 = vmul.f32 %v249, 2.1237322e-06
  %v251 = vadd.f32 %v250, 0.00028619796
  %v252 = vmul.f32 %v249, %v251
  %v253 = vadd.f32 %v252, 0.0036580483
  %v254 = vmul.f32 %v249, %v253
  %v255 = vadd.f32 %v254, 0.05243302
  %v256 = vmul.f32 %v249, %v255
  %v257 = vadd.f32 %v256, 0.18741608
  %v258 = vmul.f32 %v249, %v257
  %v259 = vadd.f32 %v258, 1.1283791
  %v260 = vmul.f32 %v193, %v259
  %v261 = vmul.f32 %v249, 3.8918573e-05
  %v262 = vadd.f32 %v261, 0.001143296
  %v263 = vmul.f32 %v249, %v262
  %v264 = vadd.f32 %v263, 0.014752088
  %v265 = vmul.f32 %v249, %v264
  %v266 = vadd.f32 %v265, 0.112945676
  %v267 = vmul.f32 %v249, %v266
  %v268 = vadd.f32 %v267, 0.4994258
  %v269 = vmul.f32 %v249, %v268
  %v270 = vadd.f32 %v269, 1.0
  %v271 = vrcp.pop %v270
  %v272 = vmul.f32 %v270, %v271
  %v273 = vsub.f32 1.0, %v272
  %v274 = vmul.f32 %v271, %v273
  %v275 = vadd.f32 %v271, %v274
  %vm276 = vweird.f32 %v270
  %vm277 = vweird.f32 %v271
  %vm278 = vmor %vm276, %vm277
  %v279 = vsel %vm278, %v271, %v275
  %v280 = vand.u32 2147483647, %v270
  %vm281 = vcmp.eq.f32.partialorder %v280, 8.507059e+37
  %v282 = vand.u32 %v270, 2147483648
  %v283 = vor.u32 1.1754944e-38, %v282
  %v284 = vsel %vm281, %v283, %v279
  %v285 = vmul.f32 %v260, %v284
  %v286 = vmin.f32 %v285, 1.0
  %v287 = vmax.f32 %v286, -1.0
  %v288 = vmul.f32 %v194, %v194
  %v289 = vmin.f32 16.0, %v288
  %v290 = vmul.f32 %v289, 2.1237322e-06
  %v291 = vadd.f32 %v290, 0.00028619796
  %v292 = vmul.f32 %v289, %v291
  %v293 = vadd.f32 %v292, 0.0036580483
  %v294 = vmul.f32 %v289, %v293
  %v295 = vadd.f32 %v294, 0.05243302
  %v296 = vmul.f32 %v289, %v295
  %v297 = vadd.f32 %v296, 0.18741608
  %v298 = vmul.f32 %v289, %v297
  %v299 = vadd.f32 %v298, 1.1283791
  %v300 = vmul.f32 %v194, %v299
  %v301 = vmul.f32 %v289, 3.8918573e-05
  %v302 = vadd.f32 %v301, 0.001143296
  %v303 = vmul.f32 %v289, %v302
  %v304 = vadd.f32 %v303, 0.014752088
  %v305 = vmul.f32 %v289, %v304
  %v306 = vadd.f32 %v305, 0.112945676
  %v307 = vmul.f32 %v289, %v306
  %v308 = vadd.f32 %v307, 0.4994258
  %v309 = vmul.f32 %v289, %v308
  %v310 = vadd.f32 %v309, 1.0
  %v311 = vrcp.pop %v310
  %v312 = vmul.f32 %v310, %v311
  %v313 = vsub.f32 1.0, %v312
  %v314 = vmul.f32 %v311, %v313
  %v315 = vadd.f32 %v311, %v314
  %vm316 = vweird.f32 %v310
  %vm317 = vweird.f32 %v311
  %vm318 = vmor %vm316, %vm317
  %v319 = vsel %vm318, %v311, %v315
  %v320 = vand.u32 2147483647, %v310
  %vm321 = vcmp.eq.f32.partialorder %v320, 8.507059e+37
  %v322 = vand.u32 %v310, 2147483648
  %v323 = vor.u32 1.1754944e-38, %v322
  %v324 = vsel %vm321, %v323, %v319
  %v325 = vmul.f32 %v300, %v324
  %v326 = vmin.f32 %v325, 1.0
  %v327 = vmax.f32 %v326, -1.0
  %v328 = vmul.f32 %v195, %v195
  %v329 = vmin.f32 16.0, %v328
  %v330 = vmul.f32 %v329, 2.1237322e-06
  %v331 = vadd.f32 %v330, 0.00028619796
  %v332 = vmul.f32 %v329, %v331
  %v333 = vadd.f32 %v332, 0.0036580483
  %v334 = vmul.f32 %v329, %v333
  %v335 = vadd.f32 %v334, 0.05243302
  %v336 = vmul.f32 %v329, %v335
  %v337 = vadd.f32 %v336, 0.18741608
  %v338 = vmul.f32 %v329, %v337
  %v339 = vadd.f32 %v338, 1.1283791
  %v340 = vmul.f32 %v195, %v339
  %v341 = vmul.f32 %v329, 3.8918573e-05
  %v342 = vadd.f32 %v341, 0.001143296
  %v343 = vmul.f32 %v329, %v342
  %v344 = vadd.f32 %v343, 0.014752088
  %v345 = vmul.f32 %v329, %v344
  %v346 = vadd.f32 %v345, 0.112945676
  %v347 = vmul.f32 %v329, %v346
  %v348 = vadd.f32 %v347, 0.4994258
  %v349 = vmul.f32 %v329, %v348
  %v350 = vadd.f32 %v349, 1.0
  %v351 = vrcp.pop %v350
  %v352 = vmul.f32 %v350, %v351
  %v353 = vsub.f32 1.0, %v352
  %v354 = vmul.f32 %v351, %v353
  %v355 = vadd.f32 %v351, %v354
  %vm356 = vweird.f32 %v350
  %vm357 = vweird.f32 %v351
  %vm358 = vmor %vm356, %vm357
  %v359 = vsel %vm358, %v351, %v355
  %v360 = vand.u32 2147483647, %v350
  %vm361 = vcmp.eq.f32.partialorder %v360, 8.507059e+37
  %v362 = vand.u32 %v350, 2147483648
  %v363 = vor.u32 1.1754944e-38, %v362
  %v364 = vsel %vm361, %v363, %v359
  %v365 = vmul.f32 %v340, %v364
  %v366 = vmin.f32 %v365, 1.0
  %v367 = vmax.f32 %v366, -1.0
  %v368 = vmul.f32 %v196, %v196
  %v369 = vmin.f32 16.0, %v368
  %v370 = vmul.f32 %v369, 2.1237322e-06
  %v371 = vadd.f32 %v370, 0.00028619796
  %v372 = vmul.f32 %v369, %v371
  %v373 = vadd.f32 %v372, 0.0036580483
  %v374 = vmul.f32 %v369, %v373
  %v375 = vadd.f32 %v374, 0.05243302
  %v376 = vmul.f32 %v369, %v375
  %v377 = vadd.f32 %v376, 0.18741608
  %v378 = vmul.f32 %v369, %v377
  %v379 = vadd.f32 %v378, 1.1283791
  %v380 = vmul.f32 %v196, %v379
  %v381 = vmul.f32 %v369, 3.8918573e-05
  %v382 = vadd.f32 %v381, 0.001143296
  %v383 = vmul.f32 %v369, %v382
  %v384 = vadd.f32 %v383, 0.014752088
  %v385 = vmul.f32 %v369, %v384
  %v386 = vadd.f32 %v385, 0.112945676
  %v387 = vmul.f32 %v369, %v386
  %v388 = vadd.f32 %v387, 0.4994258
  %v389 = vmul.f32 %v369, %v388
  %v390 = vadd.f32 %v389, 1.0
  %v391 = vrcp.pop %v390
  %v392 = vmul.f32 %v390, %v391
  %v393 = vsub.f32 1.0, %v392
  %v394 = vmul.f32 %v391, %v393
  %v395 = vadd.f32 %v391, %v394
  %vm396 = vweird.f32 %v390
  %vm397 = vweird.f32 %v391
  %vm398 = vmor %vm396, %vm397
  %v399 = vsel %vm398, %v391, %v395
  %v400 = vand.u32 2147483647, %v390
  %vm401 = vcmp.eq.f32.partialorder %v400, 8.507059e+37
  %v402 = vand.u32 %v390, 2147483648
  %v403 = vor.u32 1.1754944e-38, %v402
  %v404 = vsel %vm401, %v403, %v399
  %v405 = vmul.f32 %v380, %v404
  %v406 = vmin.f32 %v405, 1.0
  %v407 = vmax.f32 %v406, -1.0
  %v408 = vmul.f32 %v197, %v197
  %v409 = vmin.f32 16.0, %v408
  %v410 = vmul.f32 %v409, 2.1237322e-06
  %v411 = vadd.f32 %v410, 0.00028619796
  %v412 = vmul.f32 %v409, %v411
  %v413 = vadd.f32 %v412, 0.0036580483
  %v414 = vmul.f32 %v409, %v413
  %v415 = vadd.f32 %v414, 0.05243302
  %v416 = vmul.f32 %v409, %v415
  %v417 = vadd.f32 %v416, 0.18741608
  %v418 = vmul.f32 %v409, %v417
  %v419 = vadd.f32 %v418, 1.1283791
  %v420 = vmul.f32 %v197, %v419
  %v421 = vmul.f32 %v409, 3.8918573e-05
  %v422 = vadd.f32 %v421, 0.001143296
  %v423 = vmul.f32 %v409, %v422
  %v424 = vadd.f32 %v423, 0.014752088
  %v425 = vmul.f32 %v409, %v424
  %v426 = vadd.f32 %v425, 0.112945676
  %v427 = vmul.f32 %v409, %v426
  %v428 = vadd.f32 %v427, 0.4994258
  %v429 = vmul.f32 %v409, %v428
  %v430 = vadd.f32 %v429, 1.0
  %v431 = vrcp.pop %v430
  %v432 = vmul.f32 %v430, %v431
  %v433 = vsub.f32 1.0, %v432
  %v434 = vmul.f32 %v431, %v433
  %v435 = vadd.f32 %v431, %v434
  %vm436 = vweird.f32 %v430
  %vm437 = vweird.f32 %v431
  %vm438 = vmor %vm436, %vm437
  %v439 = vsel %vm438, %v431, %v435
  %v440 = vand.u32 2147483647, %v430
  %vm441 = vcmp.eq.f32.partialorder %v440, 8.507059e+37
  %v442 = vand.u32 %v430, 2147483648
  %v443 = vor.u32 1.1754944e-38, %v442
  %v444 = vsel %vm441, %v443, %v439
  %v445 = vmul.f32 %v420, %v444
  %v446 = vmin.f32 %v445, 1.0
  %v447 = vmax.f32 %v446, -1.0
  %v448 = vmul.f32 %v198, %v198
  %v449 = vmin.f32 16.0, %v448
  %v450 = vmul.f32 %v449, 2.1237322e-06
  %v451 = vadd.f32 %v450, 0.00028619796
  %v452 = vmul.f32 %v449, %v451
  %v453 = vadd.f32 %v452, 0.0036580483
  %v454 = vmul.f32 %v449, %v453
  %v455 = vadd.f32 %v454, 0.05243302
  %v456 = vmul.f32 %v449, %v455
  %v457 = vadd.f32 %v456, 0.18741608
  %v458 = vmul.f32 %v449, %v457
  %v459 = vadd.f32 %v458, 1.1283791
  %v460 = vmul.f32 %v198, %v459
  %v461 = vmul.f32 %v449, 3.8918573e-05
  %v462 = vadd.f32 %v461, 0.001143296
  %v463 = vmul.f32 %v449, %v462
  %v464 = vadd.f32 %v463, 0.014752088
  %v465 = vmul.f32 %v449, %v464
  %v466 = vadd.f32 %v465, 0.112945676
  %v467 = vmul.f32 %v449, %v466
  %v468 = vadd.f32 %v467, 0.4994258
  %v469 = vmul.f32 %v449, %v468
  %v470 = vadd.f32 %v469, 1.0
  %v471 = vrcp.pop %v470
  %v472 = vmul.f32 %v470, %v471
  %v473 = vsub.f32 1.0, %v472
  %v474 = vmul.f32 %v471, %v473
  %v475 = vadd.f32 %v471, %v474
  %vm476 = vweird.f32 %v470
  %vm477 = vweird.f32 %v471
  %vm478 = vmor %vm476, %vm477
  %v479 = vsel %vm478, %v471, %v475
  %v480 = vand.u32 2147483647, %v470
  %vm481 = vcmp.eq.f32.partialorder %v480, 8.507059e+37
  %v482 = vand.u32 %v470, 2147483648
  %v483 = vor.u32 1.1754944e-38, %v482
  %v484 = vsel %vm481, %v483, %v479
  %v485 = vmul.f32 %v460, %v484
  %v486 = vmin.f32 %v485, 1.0
  %v487 = vmax.f32 %v486, -1.0
  %v488 = vmul.f32 %v199, %v199
  %v489 = vmin.f32 16.0, %v488
  %v490 = vmul.f32 %v489, 2.1237322e-06
  %v491 = vadd.f32 %v490, 0.00028619796
  %v492 = vmul.f32 %v489, %v491
  %v493 = vadd.f32 %v492, 0.0036580483
  %v494 = vmul.f32 %v489, %v493
  %v495 = vadd.f32 %v494, 0.05243302
  %v496 = vmul.f32 %v489, %v495
  %v497 = vadd.f32 %v496, 0.18741608
  %v498 = vmul.f32 %v489, %v497
  %v499 = vadd.f32 %v498, 1.1283791
  %v500 = vmul.f32 %v199, %v499
  %v501 = vmul.f32 %v489, 3.8918573e-05
  %v502 = vadd.f32 %v501, 0.001143296
  %v503 = vmul.f32 %v489, %v502
  %v504 = vadd.f32 %v503, 0.014752088
  %v505 = vmul.f32 %v489, %v504
  %v506 = vadd.f32 %v505, 0.112945676
  %v507 = vmul.f32 %v489, %v506
  %v508 = vadd.f32 %v507, 0.4994258
  %v509 = vmul.f32 %v489, %v508
  %v510 = vadd.f32 %v509, 1.0
  %v511 = vrcp.pop %v510
  %v512 = vmul.f32 %v510, %v511
  %v513 = vsub.f32 1.0, %v512
  %v514 = vmul.f32 %v511, %v513
  %v515 = vadd.f32 %v511, %v514
  %vm516 = vweird.f32 %v510
  %vm517 = vweird.f32 %v511
  %vm518 = vmor %vm516, %vm517
  %v519 = vsel %vm518, %v511, %v515
  %v520 = vand.u32 2147483647, %v510
  %vm521 = vcmp.eq.f32.partialorder %v520, 8.507059e+37
  %v522 = vand.u32 %v510, 2147483648
  %v523 = vor.u32 1.1754944e-38, %v522
  %v524 = vsel %vm521, %v523, %v519
  %v525 = vmul.f32 %v500, %v524
  %v526 = vmin.f32 %v525, 1.0
  %v527 = vmax.f32 %v526, -1.0
  %v528 = vmul.f32 %v200, %v200
  %v529 = vmin.f32 16.0, %v528
  %v530 = vmul.f32 %v529, 2.1237322e-06
  %v531 = vadd.f32 %v530, 0.00028619796
  %v532 = vmul.f32 %v529, %v531
  %v533 = vadd.f32 %v532, 0.0036580483
  %v534 = vmul.f32 %v529, %v533
  %v535 = vadd.f32 %v534, 0.05243302
  %v536 = vmul.f32 %v529, %v535
  %v537 = vadd.f32 %v536, 0.18741608
  %v538 = vmul.f32 %v529, %v537
  %v539 = vadd.f32 %v538, 1.1283791
  %v540 = vmul.f32 %v200, %v539
  %v541 = vmul.f32 %v529, 3.8918573e-05
  %v542 = vadd.f32 %v541, 0.001143296
  %v543 = vmul.f32 %v529, %v542
  %v544 = vadd.f32 %v543, 0.014752088
  %v545 = vmul.f32 %v529, %v544
  %v546 = vadd.f32 %v545, 0.112945676
  %v547 = vmul.f32 %v529, %v546
  %v548 = vadd.f32 %v547, 0.4994258
  %v549 = vmul.f32 %v529, %v548
  %v550 = vadd.f32 %v549, 1.0
  %v551 = vrcp.pop %v550
  %v552 = vmul.f32 %v550, %v551
  %v553 = vsub.f32 1.0, %v552
  %v554 = vmul.f32 %v551, %v553
  %v555 = vadd.f32 %v551, %v554
  %vm556 = vweird.f32 %v550
  %vm557 = vweird.f32 %v551
  %vm558 = vmor %vm556, %vm557
  %v559 = vsel %vm558, %v551, %v555
  %v560 = vand.u32 2147483647, %v550
  %vm561 = vcmp.eq.f32.partialorder %v560, 8.507059e+37
  %v562 = vand.u32 %v550, 2147483648
  %v563 = vor.u32 1.1754944e-38, %v562
  %v564 = vsel %vm561, %v563, %v559
  %v565 = vmul.f32 %v540, %v564
  %v566 = vmin.f32 %v565, 1.0
  %v567 = vmax.f32 %v566, -1.0
  %v568 = vmul.f32 %v201, %v201
  %v569 = vmin.f32 16.0, %v568
  %v570 = vmul.f32 %v569, 2.1237322e-06
  %v571 = vadd.f32 %v570, 0.00028619796
  %v572 = vmul.f32 %v569, %v571
  %v573 = vadd.f32 %v572, 0.0036580483
  %v574 = vmul.f32 %v569, %v573
  %v575 = vadd.f32 %v574, 0.05243302
  %v576 = vmul.f32 %v569, %v575
  %v577 = vadd.f32 %v576, 0.18741608
  %v578 = vmul.f32 %v569, %v577
  %v579 = vadd.f32 %v578, 1.1283791
  %v580 = vmul.f32 %v201, %v579
  %v581 = vmul.f32 %v569, 3.8918573e-05
  %v582 = vadd.f32 %v581, 0.001143296
  %v583 = vmul.f32 %v569, %v582
  %v584 = vadd.f32 %v583, 0.014752088
  %v585 = vmul.f32 %v569, %v584
  %v586 = vadd.f32 %v585, 0.112945676
  %v587 = vmul.f32 %v569, %v586
  %v588 = vadd.f32 %v587, 0.4994258
  %v589 = vmul.f32 %v569, %v588
  %v590 = vadd.f32 %v589, 1.0
  %v591 = vrcp.pop %v590
  %v592 = vmul.f32 %v590, %v591
  %v593 = vsub.f32 1.0, %v592
  %v594 = vmul.f32 %v591, %v593
  %v595 = vadd.f32 %v591, %v594
  %vm596 = vweird.f32 %v590
  %vm597 = vweird.f32 %v591
  %vm598 = vmor %vm596, %vm597
  %v599 = vsel %vm598, %v591, %v595
  %v600 = vand.u32 2147483647, %v590
  %vm601 = vcmp.eq.f32.partialorder %v600, 8.507059e+37
  %v602 = vand.u32 %v590, 2147483648
  %v603 = vor.u32 1.1754944e-38, %v602
  %v604 = vsel %vm601, %v603, %v599
  %v605 = vmul.f32 %v580, %v604
  %v606 = vmin.f32 %v605, 1.0
  %v607 = vmax.f32 %v606, -1.0
  %v608 = vmul.f32 %v202, %v202
  %v609 = vmin.f32 16.0, %v608
  %v610 = vmul.f32 %v609, 2.1237322e-06
  %v611 = vadd.f32 %v610, 0.00028619796
  %v612 = vmul.f32 %v609, %v611
  %v613 = vadd.f32 %v612, 0.0036580483
  %v614 = vmul.f32 %v609, %v613
  %v615 = vadd.f32 %v614, 0.05243302
  %v616 = vmul.f32 %v609, %v615
  %v617 = vadd.f32 %v616, 0.18741608
  %v618 = vmul.f32 %v609, %v617
  %v619 = vadd.f32 %v618, 1.1283791
  %v620 = vmul.f32 %v202, %v619
  %v621 = vmul.f32 %v609, 3.8918573e-05
  %v622 = vadd.f32 %v621, 0.001143296
  %v623 = vmul.f32 %v609, %v622
  %v624 = vadd.f32 %v623, 0.014752088
  %v625 = vmul.f32 %v609, %v624
  %v626 = vadd.f32 %v625, 0.112945676
  %v627 = vmul.f32 %v609, %v626
  %v628 = vadd.f32 %v627, 0.4994258
  %v629 = vmul.f32 %v609, %v628
  %v630 = vadd.f32 %v629, 1.0
  %v631 = vrcp.pop %v630
  %v632 = vmul.f32 %v630, %v631
  %v633 = vsub.f32 1.0, %v632
  %v634 = vmul.f32 %v631, %v633
  %v635 = vadd.f32 %v631, %v634
  %vm636 = vweird.f32 %v630
  %vm637 = vweird.f32 %v631
  %vm638 = vmor %vm636, %vm637
  %v639 = vsel %vm638, %v631, %v635
  %v640 = vand.u32 2147483647, %v630
  %vm641 = vcmp.eq.f32.partialorder %v640, 8.507059e+37
  %v642 = vand.u32 %v630, 2147483648
  %v643 = vor.u32 1.1754944e-38, %v642
  %v644 = vsel %vm641, %v643, %v639
  %v645 = vmul.f32 %v620, %v644
  %v646 = vmin.f32 %v645, 1.0
  %v647 = vmax.f32 %v646, -1.0
  %v648 = vmul.f32 %v203, %v203
  %v649 = vmin.f32 16.0, %v648
  %v650 = vmul.f32 %v649, 2.1237322e-06
  %v651 = vadd.f32 %v650, 0.00028619796
  %v652 = vmul.f32 %v649, %v651
  %v653 = vadd.f32 %v652, 0.0036580483
  %v654 = vmul.f32 %v649, %v653
  %v655 = vadd.f32 %v654, 0.05243302
  %v656 = vmul.f32 %v649, %v655
  %v657 = vadd.f32 %v656, 0.18741608
  %v658 = vmul.f32 %v649, %v657
  %v659 = vadd.f32 %v658, 1.1283791
  %v660 = vmul.f32 %v203, %v659
  %v661 = vmul.f32 %v649, 3.8918573e-05
  %v662 = vadd.f32 %v661, 0.001143296
  %v663 = vmul.f32 %v649, %v662
  %v664 = vadd.f32 %v663, 0.014752088
  %v665 = vmul.f32 %v649, %v664
  %v666 = vadd.f32 %v665, 0.112945676
  %v667 = vmul.f32 %v649, %v666
  %v668 = vadd.f32 %v667, 0.4994258
  %v669 = vmul.f32 %v649, %v668
  %v670 = vadd.f32 %v669, 1.0
  %v671 = vrcp.pop %v670
  %v672 = vmul.f32 %v670, %v671
  %v673 = vsub.f32 1.0, %v672
  %v674 = vmul.f32 %v671, %v673
  %v675 = vadd.f32 %v671, %v674
  %vm676 = vweird.f32 %v670
  %vm677 = vweird.f32 %v671
  %vm678 = vmor %vm676, %vm677
  %v679 = vsel %vm678, %v671, %v675
  %v680 = vand.u32 2147483647, %v670
  %vm681 = vcmp.eq.f32.partialorder %v680, 8.507059e+37
  %v682 = vand.u32 %v670, 2147483648
  %v683 = vor.u32 1.1754944e-38, %v682
  %v684 = vsel %vm681, %v683, %v679
  %v685 = vmul.f32 %v660, %v684
  %v686 = vmin.f32 %v685, 1.0
  %v687 = vmax.f32 %v686, -1.0
  %v688 = vmul.f32 %v204, %v204
  %v689 = vmin.f32 16.0, %v688
  %v690 = vmul.f32 %v689, 2.1237322e-06
  %v691 = vadd.f32 %v690, 0.00028619796
  %v692 = vmul.f32 %v689, %v691
  %v693 = vadd.f32 %v692, 0.0036580483
  %v694 = vmul.f32 %v689, %v693
  %v695 = vadd.f32 %v694, 0.05243302
  %v696 = vmul.f32 %v689, %v695
  %v697 = vadd.f32 %v696, 0.18741608
  %v698 = vmul.f32 %v689, %v697
  %v699 = vadd.f32 %v698, 1.1283791
  %v700 = vmul.f32 %v204, %v699
  %v701 = vmul.f32 %v689, 3.8918573e-05
  %v702 = vadd.f32 %v701, 0.001143296
  %v703 = vmul.f32 %v689, %v702
  %v704 = vadd.f32 %v703, 0.014752088
  %v705 = vmul.f32 %v689, %v704
  %v706 = vadd.f32 %v705, 0.112945676
  %v707 = vmul.f32 %v689, %v706
  %v708 = vadd.f32 %v707, 0.4994258
  %v709 = vmul.f32 %v689, %v708
  %v710 = vadd.f32 %v709, 1.0
  %v711 = vrcp.pop %v710
  %v712 = vmul.f32 %v710, %v711
  %v713 = vsub.f32 1.0, %v712
  %v714 = vmul.f32 %v711, %v713
  %v715 = vadd.f32 %v711, %v714
  %vm716 = vweird.f32 %v710
  %vm717 = vweird.f32 %v711
  %vm718 = vmor %vm716, %vm717
  %v719 = vsel %vm718, %v711, %v715
  %v720 = vand.u32 2147483647, %v710
  %vm721 = vcmp.eq.f32.partialorder %v720, 8.507059e+37
  %v722 = vand.u32 %v710, 2147483648
  %v723 = vor.u32 1.1754944e-38, %v722
  %v724 = vsel %vm721, %v723, %v719
  %v725 = vmul.f32 %v700, %v724
  %v726 = vmin.f32 %v725, 1.0
  %v727 = vmax.f32 %v726, -1.0
  %v728 = vmul.f32 %v205, %v205
  %v729 = vmin.f32 16.0, %v728
  %v730 = vmul.f32 %v729, 2.1237322e-06
  %v731 = vadd.f32 %v730, 0.00028619796
  %v732 = vmul.f32 %v729, %v731
  %v733 = vadd.f32 %v732, 0.0036580483
  %v734 = vmul.f32 %v729, %v733
  %v735 = vadd.f32 %v734, 0.05243302
  %v736 = vmul.f32 %v729, %v735
  %v737 = vadd.f32 %v736, 0.18741608
  %v738 = vmul.f32 %v729, %v737
  %v739 = vadd.f32 %v738, 1.1283791
  %v740 = vmul.f32 %v205, %v739
  %v741 = vmul.f32 %v729, 3.8918573e-05
  %v742 = vadd.f32 %v741, 0.001143296
  %v743 = vmul.f32 %v729, %v742
  %v744 = vadd.f32 %v743, 0.014752088
  %v745 = vmul.f32 %v729, %v744
  %v746 = vadd.f32 %v745, 0.112945676
  %v747 = vmul.f32 %v729, %v746
  %v748 = vadd.f32 %v747, 0.4994258
  %v749 = vmul.f32 %v729, %v748
  %v750 = vadd.f32 %v749, 1.0
  %v751 = vrcp.pop %v750
  %v752 = vmul.f32 %v750, %v751
  %v753 = vsub.f32 1.0, %v752
  %v754 = vmul.f32 %v751, %v753
  %v755 = vadd.f32 %v751, %v754
  %vm756 = vweird.f32 %v750
  %vm757 = vweird.f32 %v751
  %vm758 = vmor %vm756, %vm757
  %v759 = vsel %vm758, %v751, %v755
  %v760 = vand.u32 2147483647, %v750
  %vm761 = vcmp.eq.f32.partialorder %v760, 8.507059e+37
  %v762 = vand.u32 %v750, 2147483648
  %v763 = vor.u32 1.1754944e-38, %v762
  %v764 = vsel %vm761, %v763, %v759
  %v765 = vmul.f32 %v740, %v764
  %v766 = vmin.f32 %v765, 1.0
  %v767 = vmax.f32 %v766, -1.0
  %v768 = vmul.f32 %v206, %v206
  %v769 = vmin.f32 16.0, %v768
  %v770 = vmul.f32 %v769, 2.1237322e-06
  %v771 = vadd.f32 %v770, 0.00028619796
  %v772 = vmul.f32 %v769, %v771
  %v773 = vadd.f32 %v772, 0.0036580483
  %v774 = vmul.f32 %v769, %v773
  %v775 = vadd.f32 %v774, 0.05243302
  %v776 = vmul.f32 %v769, %v775
  %v777 = vadd.f32 %v776, 0.18741608
  %v778 = vmul.f32 %v769, %v777
  %v779 = vadd.f32 %v778, 1.1283791
  %v780 = vmul.f32 %v206, %v779
  %v781 = vmul.f32 %v769, 3.8918573e-05
  %v782 = vadd.f32 %v781, 0.001143296
  %v783 = vmul.f32 %v769, %v782
  %v784 = vadd.f32 %v783, 0.014752088
  %v785 = vmul.f32 %v769, %v784
  %v786 = vadd.f32 %v785, 0.112945676
  %v787 = vmul.f32 %v769, %v786
  %v788 = vadd.f32 %v787, 0.4994258
  %v789 = vmul.f32 %v769, %v788
  %v790 = vadd.f32 %v789, 1.0
  %v791 = vrcp.pop %v790
  %v792 = vmul.f32 %v790, %v791
  %v793 = vsub.f32 1.0, %v792
  %v794 = vmul.f32 %v791, %v793
  %v795 = vadd.f32 %v791, %v794
  %vm796 = vweird.f32 %v790
  %vm797 = vweird.f32 %v791
  %vm798 = vmor %vm796, %vm797
  %v799 = vsel %vm798, %v791, %v795
  %v800 = vand.u32 2147483647, %v790
  %vm801 = vcmp.eq.f32.partialorder %v800, 8.507059e+37
  %v802 = vand.u32 %v790, 2147483648
  %v803 = vor.u32 1.1754944e-38, %v802
  %v804 = vsel %vm801, %v803, %v799
  %v805 = vmul.f32 %v780, %v804
  %v806 = vmin.f32 %v805, 1.0
  %v807 = vmax.f32 %v806, -1.0
  %v808 = vmul.f32 %v207, %v207
  %v809 = vmin.f32 16.0, %v808
  %v810 = vmul.f32 %v809, 2.1237322e-06
  %v811 = vadd.f32 %v810, 0.00028619796
  %v812 = vmul.f32 %v809, %v811
  %v813 = vadd.f32 %v812, 0.0036580483
  %v814 = vmul.f32 %v809, %v813
  %v815 = vadd.f32 %v814, 0.05243302
  %v816 = vmul.f32 %v809, %v815
  %v817 = vadd.f32 %v816, 0.18741608
  %v818 = vmul.f32 %v809, %v817
  %v819 = vadd.f32 %v818, 1.1283791
  %v820 = vmul.f32 %v207, %v819
  %v821 = vmul.f32 %v809, 3.8918573e-05
  %v822 = vadd.f32 %v821, 0.001143296
  %v823 = vmul.f32 %v809, %v822
  %v824 = vadd.f32 %v823, 0.014752088
  %v825 = vmul.f32 %v809, %v824
  %v826 = vadd.f32 %v825, 0.112945676
  %v827 = vmul.f32 %v809, %v826
  %v828 = vadd.f32 %v827, 0.4994258
  %v829 = vmul.f32 %v809, %v828
  %v830 = vadd.f32 %v829, 1.0
  %v831 = vrcp.pop %v830
  %v832 = vmul.f32 %v830, %v831
  %v833 = vsub.f32 1.0, %v832
  %v834 = vmul.f32 %v831, %v833
  %v835 = vadd.f32 %v831, %v834
  %vm836 = vweird.f32 %v830
  %vm837 = vweird.f32 %v831
  %vm838 = vmor %vm836, %vm837
  %v839 = vsel %vm838, %v831, %v835
  %v840 = vand.u32 2147483647, %v830
  %vm841 = vcmp.eq.f32.partialorder %v840, 8.507059e+37
  %v842 = vand.u32 %v830, 2147483648
  %v843 = vor.u32 1.1754944e-38, %v842
  %v844 = vsel %vm841, %v843, %v839
  %v845 = vmul.f32 %v820, %v844
  %v846 = vmin.f32 %v845, 1.0
  %v847 = vmax.f32 %v846, -1.0
  %v848 = vadd.f32 %v247, 1.0
  %v849 = vadd.f32 %v287, 1.0
  %v850 = vadd.f32 %v327, 1.0
  %v851 = vadd.f32 %v367, 1.0
  %v852 = vadd.f32 %v407, 1.0
  %v853 = vadd.f32 %v447, 1.0
  %v854 = vadd.f32 %v487, 1.0
  %v855 = vadd.f32 %v527, 1.0
  %v856 = vadd.f32 %v567, 1.0
  %v857 = vadd.f32 %v607, 1.0
  %v858 = vadd.f32 %v647, 1.0
  %v859 = vadd.f32 %v687, 1.0
  %v860 = vadd.f32 %v727, 1.0
  %v861 = vadd.f32 %v767, 1.0
  %v862 = vadd.f32 %v807, 1.0
  %v863 = vadd.f32 %v847, 1.0
  %v864 = vmul.f32 %v176, %v848
  %v865 = vmul.f32 %v177, %v849
  %v866 = vmul.f32 %v178, %v850
  %v867 = vmul.f32 %v179, %v851
  %v868 = vmul.f32 %v180, %v852
  %v869 = vmul.f32 %v181, %v853
  %v870 = vmul.f32 %v182, %v854
  %v871 = vmul.f32 %v183, %v855
  %v872 = vmul.f32 %v184, %v856
  %v873 = vmul.f32 %v185, %v857
  %v874 = vmul.f32 %v186, %v858
  %v875 = vmul.f32 %v187, %v859
  %v876 = vmul.f32 %v188, %v860
  %v877 = vmul.f32 %v189, %v861
  %v878 = vmul.f32 %v190, %v862
  %v879 = vmul.f32 %v191, %v863
  %v880 = vpack.c.bf16 %v865, %v864
  %v881 = vpack.c.bf16 %v867, %v866
  %v882 = vpack.c.bf16 %v869, %v868
  %v883 = vpack.c.bf16 %v871, %v870
  %v884 = vpack.c.bf16 %v873, %v872
  %v885 = vpack.c.bf16 %v875, %v874
  %v886 = vpack.c.bf16 %v877, %v876
  %v887 = vpack.c.bf16 %v879, %v878
  %v888 = vld [vmem:[%s3] sm:$0xf]
  %v889 = vld [vmem:[%s3 + $0x4] sm:$0xf]
  %v890 = vld [vmem:[%s3 + $0x8] sm:$0xf]
  %v891 = vld [vmem:[%s3 + $0xc] sm:$0xf]
  %v892 = vld [vmem:[%s3 + $0x10] sm:$0xf]
  %v893 = vld [vmem:[%s3 + $0x14] sm:$0xf]
  %v894 = vld [vmem:[%s3 + $0x18] sm:$0xf]
  %v895 = vld [vmem:[%s3 + $0x1c] sm:$0xf]
  %v896 = vld [vmem:[%s3 + $0x20] sm:$0xf]
  %v897 = vld [vmem:[%s3 + $0x24] sm:$0xf]
  %v898 = vld [vmem:[%s3 + $0x28] sm:$0xf]
  %v899 = vld [vmem:[%s3 + $0x2c] sm:$0xf]
  %v900 = vld [vmem:[%s3 + $0x30] sm:$0xf]
  %v901 = vld [vmem:[%s3 + $0x34] sm:$0xf]
  %v902 = vld [vmem:[%s3 + $0x38] sm:$0xf]
  %v903 = vld [vmem:[%s3 + $0x3c] sm:$0xf]
  %v920 = vunpack.c.l.b16 %v888
  %v921 = vunpack.c.l.b16 %v889
  %v922 = vunpack.c.l.b16 %v890
  %v923 = vunpack.c.l.b16 %v891
  %v924 = vunpack.c.l.b16 %v892
  %v925 = vunpack.c.l.b16 %v893
  %v926 = vunpack.c.l.b16 %v894
  %v927 = vunpack.c.l.b16 %v895
  %v928 = vunpack.c.l.b16 %v896
  %v929 = vunpack.c.l.b16 %v897
  %v930 = vunpack.c.l.b16 %v898
  %v931 = vunpack.c.l.b16 %v899
  %v932 = vunpack.c.l.b16 %v900
  %v933 = vunpack.c.l.b16 %v901
  %v934 = vunpack.c.l.b16 %v902
  %v935 = vunpack.c.l.b16 %v903
  %v936 = vpack.c.b16 %v921, %v920
  %v937 = vpack.c.b16 %v923, %v922
  %v938 = vpack.c.b16 %v925, %v924
  %v939 = vpack.c.b16 %v927, %v926
  %v940 = vpack.c.b16 %v929, %v928
  %v941 = vpack.c.b16 %v931, %v930
  %v942 = vpack.c.b16 %v933, %v932
  %v943 = vpack.c.b16 %v935, %v934
  %952 = vmatpush.bf16.msra.mxu0 %v943
  %953 = vmatpush.bf16.msra.mxu0 %v942
  %954 = vmatpush.bf16.msra.mxu0 %v941
  %955 = vmatpush.bf16.msra.mxu0 %v940
  %956 = vmatpush.bf16.msra.mxu0 %v939
  %957 = vmatpush.bf16.msra.mxu0 %v938
  %958 = vmatpush.bf16.msra.mxu0 %v937
  %959 = vmatpush.bf16.msra.mxu0 %v936
  %960 = vmatmul.bf16.gmra.mxu0 %v880
  %v961 = vpop.f32.mrf.mxu0
  %v962 = vadd.f32 0.0, %v961
  %v963 = vpop.f32.mrf.mxu0
  %v964 = vadd.f32 0.0, %v963
  %965 = vmatmul.bf16.gmra.mxu0 %v881
  %v966 = vpop.f32.mrf.mxu0
  %v967 = vadd.f32 0.0, %v966
  %v968 = vpop.f32.mrf.mxu0
  %v969 = vadd.f32 0.0, %v968
  %970 = vmatmul.bf16.gmra.mxu0 %v882
  %v971 = vpop.f32.mrf.mxu0
  %v972 = vadd.f32 0.0, %v971
  %v973 = vpop.f32.mrf.mxu0
  %v974 = vadd.f32 0.0, %v973
  %975 = vmatmul.bf16.gmra.mxu0 %v883
  %v976 = vpop.f32.mrf.mxu0
  %v977 = vadd.f32 0.0, %v976
  %v978 = vpop.f32.mrf.mxu0
  %v979 = vadd.f32 0.0, %v978
  %980 = vmatmul.bf16.gmra.mxu0 %v884
  %v981 = vpop.f32.mrf.mxu0
  %v982 = vadd.f32 0.0, %v981
  %v983 = vpop.f32.mrf.mxu0
  %v984 = vadd.f32 0.0, %v983
  %985 = vmatmul.bf16.gmra.mxu0 %v885
  %v986 = vpop.f32.mrf.mxu0
  %v987 = vadd.f32 0.0, %v986
  %v988 = vpop.f32.mrf.mxu0
  %v989 = vadd.f32 0.0, %v988
  %990 = vmatmul.bf16.gmra.mxu0 %v886
  %v991 = vpop.f32.mrf.mxu0
  %v992 = vadd.f32 0.0, %v991
  %v993 = vpop.f32.mrf.mxu0
  %v994 = vadd.f32 0.0, %v993
  %995 = vmatmul.bf16.gmra.mxu0 %v887
  %v996 = vpop.f32.mrf.mxu0
  %v997 = vadd.f32 0.0, %v996
  %v998 = vpop.f32.mrf.mxu0
  %v999 = vadd.f32 0.0, %v998
  %1000 = vdwg.mxu0
  %v1001 = vadd.f32 %v42, %v962
  %v1002 = vadd.f32 %v43, %v964
  %v1003 = vadd.f32 %v44, %v967
  %v1004 = vadd.f32 %v45, %v969
  %v1005 = vadd.f32 %v46, %v972
  %v1006 = vadd.f32 %v47, %v974
  %v1007 = vadd.f32 %v48, %v977
  %v1008 = vadd.f32 %v49, %v979
  %v1009 = vadd.f32 %v50, %v982
  %v1010 = vadd.f32 %v51, %v984
  %v1011 = vadd.f32 %v52, %v987
  %v1012 = vadd.f32 %v53, %v989
  %v1013 = vadd.f32 %v54, %v992
  %v1014 = vadd.f32 %v55, %v994
  %v1015 = vadd.f32 %v56, %v997
  %v1016 = vadd.f32 %v57, %v999
  %1017 = vst.msk [vmem:[%s5] sm:$0xff] %vm102, %v1001
  %1018 = vst.msk [vmem:[%s5 + $0x8] sm:$0xff] %vm102, %v1002
  %1019 = vst.msk [vmem:[%s5 + $0x10] sm:$0xff] %vm102, %v1003
  %1020 = vst.msk [vmem:[%s5 + $0x18] sm:$0xff] %vm102, %v1004
  %1021 = vst.msk [vmem:[%s5 + $0x20] sm:$0xff] %vm102, %v1005
  %1022 = vst.msk [vmem:[%s5 + $0x28] sm:$0xff] %vm102, %v1006
  %1023 = vst.msk [vmem:[%s5 + $0x30] sm:$0xff] %vm102, %v1007
  %1024 = vst.msk [vmem:[%s5 + $0x38] sm:$0xff] %vm102, %v1008
  %1025 = vst.msk [vmem:[%s5 + $0x40] sm:$0xff] %vm102, %v1009
  %1026 = vst.msk [vmem:[%s5 + $0x48] sm:$0xff] %vm102, %v1010
  %1027 = vst.msk [vmem:[%s5 + $0x50] sm:$0xff] %vm102, %v1011
  %1028 = vst.msk [vmem:[%s5 + $0x58] sm:$0xff] %vm102, %v1012
  %1029 = vst.msk [vmem:[%s5 + $0x60] sm:$0xff] %vm102, %v1013
  %1030 = vst.msk [vmem:[%s5 + $0x68] sm:$0xff] %vm102, %v1014
  %1031 = vst.msk [vmem:[%s5 + $0x70] sm:$0xff] %vm102, %v1015
  %1032 = vst.msk [vmem:[%s5 + $0x78] sm:$0xff] %vm102, %v1016
  // Predicated region
  $region26: #{tpu_custom_call.1} parent=0 // pred_check
    %p1033 = pneg %p21
  $region27: #{tpu_custom_call.1} parent=0 // pred_check_branch
    %1035 = sbr.rel (%p1033) target = $region29
  $region28: #{tpu_custom_call.1} parent=0 // pred_region
    %v1036 = vld [vmem:[%s5] sm:$0xff]
    %v1037 = vld [vmem:[%s5 + $0x8] sm:$0xff]
    %v1038 = vld [vmem:[%s5 + $0x10] sm:$0xff]
    %v1039 = vld [vmem:[%s5 + $0x18] sm:$0xff]
    %v1040 = vld [vmem:[%s5 + $0x20] sm:$0xff]
    %v1041 = vld [vmem:[%s5 + $0x28] sm:$0xff]
    %v1042 = vld [vmem:[%s5 + $0x30] sm:$0xff]
    %v1043 = vld [vmem:[%s5 + $0x38] sm:$0xff]
    %v1044 = vld [vmem:[%s5 + $0x40] sm:$0xff]
    %v1045 = vld [vmem:[%s5 + $0x48] sm:$0xff]
    %v1046 = vld [vmem:[%s5 + $0x50] sm:$0xff]
    %v1047 = vld [vmem:[%s5 + $0x58] sm:$0xff]
    %v1048 = vld [vmem:[%s5 + $0x60] sm:$0xff]
    %v1049 = vld [vmem:[%s5 + $0x68] sm:$0xff]
    %v1050 = vld [vmem:[%s5 + $0x70] sm:$0xff]
    %v1051 = vld [vmem:[%s5 + $0x78] sm:$0xff]
    %v1052 = vld [vmem:[%s4] sm:$0x1]
    %v1054 = vperm.slane %v1052, 0
    %v1056 = vadd.f32 %v1036, %v1054
    %v1057 = vadd.f32 %v1037, %v1054
    %v1058 = vadd.f32 %v1038, %v1054
    %v1059 = vadd.f32 %v1039, %v1054
    %v1060 = vadd.f32 %v1040, %v1054
    %v1061 = vadd.f32 %v1041, %v1054
    %v1062 = vadd.f32 %v1042, %v1054
    %v1063 = vadd.f32 %v1043, %v1054
    %v1064 = vadd.f32 %v1044, %v1054
    %v1065 = vadd.f32 %v1045, %v1054
    %v1066 = vadd.f32 %v1046, %v1054
    %v1067 = vadd.f32 %v1047, %v1054
    %v1068 = vadd.f32 %v1048, %v1054
    %v1069 = vadd.f32 %v1049, %v1054
    %v1070 = vadd.f32 %v1050, %v1054
    %v1071 = vadd.f32 %v1051, %v1054
    %1072 = vst.msk [vmem:[%s5] sm:$0xff] %vm102, %v1056
    %1073 = vst.msk [vmem:[%s5 + $0x8] sm:$0xff] %vm102, %v1057
    %1074 = vst.msk [vmem:[%s5 + $0x10] sm:$0xff] %vm102, %v1058
    %1075 = vst.msk [vmem:[%s5 + $0x18] sm:$0xff] %vm102, %v1059
    %1076 = vst.msk [vmem:[%s5 + $0x20] sm:$0xff] %vm102, %v1060
    %1077 = vst.msk [vmem:[%s5 + $0x28] sm:$0xff] %vm102, %v1061
    %1078 = vst.msk [vmem:[%s5 + $0x30] sm:$0xff] %vm102, %v1062
    %1079 = vst.msk [vmem:[%s5 + $0x38] sm:$0xff] %vm102, %v1063
    %1080 = vst.msk [vmem:[%s5 + $0x40] sm:$0xff] %vm102, %v1064
    %1081 = vst.msk [vmem:[%s5 + $0x48] sm:$0xff] %vm102, %v1065
    %1082 = vst.msk [vmem:[%s5 + $0x50] sm:$0xff] %vm102, %v1066
    %1083 = vst.msk [vmem:[%s5 + $0x58] sm:$0xff] %vm102, %v1067
    %1084 = vst.msk [vmem:[%s5 + $0x60] sm:$0xff] %vm102, %v1068
    %1085 = vst.msk [vmem:[%s5 + $0x68] sm:$0xff] %vm102, %v1069
    %1086 = vst.msk [vmem:[%s5 + $0x70] sm:$0xff] %vm102, %v1070
    %1087 = vst.msk [vmem:[%s5 + $0x78] sm:$0xff] %vm102, %v1071
  $region29: #{tpu_custom_call.1} parent=0 // pred_fallthru
    _
  // Predicated region
  $region30: #{tpu_custom_call.1} parent=0 // pred_check
    _
  $region31: #{tpu_custom_call.1} parent=0 // pred_check_branch
    %1089 = sbr.rel (0) target = $region33
  $region32: #{tpu_custom_call.1} parent=0 // pred_region
    _
  $region33: #{tpu_custom_call.1} parent=0 // pred_fallthru
    _
  // Predicated region
  $region34: #{tpu_custom_call.1} parent=0 // pred_check
    _
  $region35: #{tpu_custom_call.1} parent=0 // pred_check_branch
    %1091 = sbr.rel (0) target = $region37
  $region36: #{tpu_custom_call.1} parent=0 // pred_region
    _
  $region37: #{tpu_custom_call.1} parent=0 // pred_fallthru
    _

</llo_original>
